<compile_context>
chip_gen: v7x
topology: tpu7x:2x2x1
jax: 0.10.0
libtpu: 0.0.40
codegen_flags: <defaults>
</compile_context>

<pallas_src>
import math

import jax
import jax.numpy as jnp
from jax.experimental import pallas as pl
from jax.experimental.pallas import tpu as pltpu


def _round_up(x, m):
    return (x + m - 1) // m * m


def _cdiv(a, b):
    return (a + b - 1) // b


def _vmem_capacity_bytes():
    """Physical VMEM per TensorCore (generation-aware), with a safe fallback."""
    try:
        cap = int(pltpu.get_tpu_info().vmem_capacity_bytes)
        if cap > 0:
            return cap
    except Exception:
        pass
    return 64 << 20          # v7x per-TC VMEM (smallest of current generations)


def _vmem_need(TM, Kp, TF, Hp, x_bytes, w_bytes, o_bytes):
    """Kernel VMEM footprint estimate (double-buffered blocks counted twice)."""
    blocks = (2 * TM * Kp * x_bytes      # streamed activation tile
              + 2 * Kp * TF * w_bytes    # W1 chunk
              + 2 * TF * Hp * w_bytes    # W2 chunk
              + 2 * 8 * TF * 4           # b1 chunk (sublane-padded)
              + 2 * 8 * Hp * 4           # b2
              + 2 * TM * Hp * o_bytes)   # output tile
    scratch = TM * Hp * 4                # f32 accumulator
    temps = (TM * Kp * w_bytes           # in-kernel bf16 copy of x
             + TM * TF * 4               # f32 h chunk
             + TM * TF * w_bytes)        # bf16 copy of h for the 2nd matmul
    return blocks + scratch + temps


def _make_ffn_kernel(approximate_gelu):
    def kernel(x_ref, w1_ref, b1_ref, w2_ref, b2_ref, o_ref, acc_ref):
        # x_ref : (TM, Kp)          w1_ref: (Kp, TF) bf16   b1_ref: (1, TF) f32
        # w2_ref: (TF, Hp) bf16     b2_ref: (1, Hp) f32
        # o_ref : (TM, Hp)          acc_ref: (TM, Hp) f32 scratch
        j = pl.program_id(1)

        @pl.when(j == 0)
        def _init():
            acc_ref[...] = jnp.zeros_like(acc_ref)

        xb = x_ref[...].astype(w1_ref.dtype)                 # bf16 for the MXU
        h = jnp.dot(xb, w1_ref[...], preferred_element_type=jnp.float32)
        h = h + b1_ref[...]
        if approximate_gelu:
            h = jax.nn.gelu(h, approximate=True)             # tanh -> EUP slot
        else:
            h = 0.5 * h * (1.0 + jax.lax.erf(h * (1.0 / math.sqrt(2.0))))
        acc_ref[...] += jnp.dot(h.astype(w2_ref.dtype), w2_ref[...],
                                preferred_element_type=jnp.float32)

        @pl.when(j == pl.num_programs(1) - 1)
        def _finish():
            o_ref[...] = (acc_ref[...] + b2_ref[...]).astype(o_ref.dtype)

    return kernel


def prepare_ffn_weights(conv_w, conv_b, lin_w, lin_b, *, kernel_size=1,
                        compute_dtype=jnp.bfloat16, f_tile=512):
    """One-time weight prep: fold k**-0.5 (in f32), transpose, cast, pad.

    conv_w: (F, H, k)  conv_b: (F,)  lin_w: (H, F)  lin_b: (H,)
    Cache the result across forward calls (decode-style small-M calls would
    otherwise pay the weight transpose/cast HBM traffic every step).
    """
    k = kernel_size
    Fdim, H, kw = conv_w.shape
    assert kw == k, f"conv_w kernel dim {kw} != kernel_size {k}"
    Hout = lin_w.shape[0]
    scale = float(k) ** (-0.5)

    Kin = k * H
    Kp = _round_up(Kin, 128)
    f_tile = max(128, _round_up(f_tile, 128))     # multiple of 256 by default
    Fp0 = _round_up(Fdim, 128)
    TF = min(f_tile, Fp0)
    Fp = _round_up(Fp0, TF)
    Hp = _round_up(Hout, 128)

    w1 = jnp.transpose(conv_w, (2, 1, 0)).reshape(Kin, Fdim) * scale   # f32 fold
    b1 = (conv_b.astype(jnp.float32) * scale).reshape(1, Fdim)
    w2 = jnp.transpose(lin_w, (1, 0))                                  # (F, Hout)
    b2 = lin_b.astype(jnp.float32).reshape(1, Hout)

    w1 = jnp.pad(w1.astype(compute_dtype), ((0, Kp - Kin), (0, Fp - Fdim)))
    b1 = jnp.pad(b1, ((0, 0), (0, Fp - Fdim)))
    w2 = jnp.pad(w2.astype(compute_dtype), ((0, Fp - Fdim), (0, Hp - Hout)))
    b2 = jnp.pad(b2, ((0, 0), (0, Hp - Hout)))

    dims = dict(k=k, H=H, Hout=Hout, F=Fdim, Kin=Kin, Kp=Kp, Fp=Fp, Hp=Hp,
                TF=TF, compute_dtype=compute_dtype)
    return (w1, b1, w2, b2), dims


def transformer_ffn_layer(x, conv_w=None, conv_b=None, lin_w=None, lin_b=None, *,
                          kernel_size=1, prepared=None, out_dtype=None,
                          compute_dtype=jnp.bfloat16, approximate_gelu=True,
                          f_tile=512):
    """Forward of TransformerFFNLayer (padding='SAME', act='gelu', dropout=0).

    x: (T, B, H).  Pass `prepared=prepare_ffn_weights(...)` to reuse padded
    bf16 weights across calls.  Returns (T_out, B, H) with T_out matching
    PyTorch's padding=k//2 behaviour (T for odd k, T+1 for even k).
    """
    if prepared is None:
        prepared = prepare_ffn_weights(conv_w, conv_b, lin_w, lin_b,
                                       kernel_size=kernel_size,
                                       compute_dtype=compute_dtype,
                                       f_tile=f_tile)
    (w1, b1, w2, b2), d = prepared
    k, H, Hout = d["k"], d["H"], d["Hout"]
    Kin, Kp, Fp, Hp, TF = d["Kin"], d["Kp"], d["Fp"], d["Hp"], d["TF"]
    compute_dtype = d["compute_dtype"]

    T, B, Hx = x.shape
    assert Hx == H, f"x hidden dim {Hx} != conv in_channels {H}"
    pad = k // 2                         # PyTorch nn.Conv1d(..., padding=k // 2)
    T_out = T + 2 * pad - k + 1
    out_dtype = x.dtype if out_dtype is None else jnp.dtype(out_dtype)

    # ---- activation slab (M, k*H) ----
    if k == 1:
        slab = x.reshape(T * B, H)       # pointwise conv: no transpose/im2col
        M = T * B
    else:
        # TODO(synk): a halo-aware per-tap accumulation (memory_space=pl.ANY +
        # manual DMA of a time tile with k-1 halo rows) would read x once;
        # the HBM im2col below reads it k times.
        x_bth = jnp.transpose(x, (1, 0, 2))
        x_pad = jnp.pad(x_bth, ((0, 0), (pad, pad), (0, 0)))
        slab = jnp.concatenate(
            [x_pad[:, j:j + T_out, :] for j in range(k)], axis=-1
        ).reshape(B * T_out, k * H)
        M = B * T_out

    # ---- M tiling: >= 2 tiles when M allows (v7x megacore), fit VMEM budget ----
    w_bytes = jnp.dtype(compute_dtype).itemsize
    o_bytes = jnp.dtype(out_dtype).itemsize
    budget = max(_vmem_capacity_bytes() - (6 << 20), 24 << 20)

    TM = min(512, max(16, _round_up(_cdiv(M, 2), 16)))
    while True:
        Mp = _round_up(M, TM)
        host_pad = (Mp != M) or (Kp != Kin)
        x_bytes = w_bytes if host_pad else jnp.dtype(slab.dtype).itemsize
        need = _vmem_need(TM, Kp, TF, Hp, x_bytes, w_bytes, o_bytes)
        if need <= budget:
            break
        new_tm = max(16, _round_up(TM // 2, 16))
        if new_tm == TM:
            break
        TM = new_tm

    if host_pad:
        # A pad forces a copy anyway -> fuse the bf16 cast into it.
        slab = jnp.pad(slab.astype(compute_dtype), ((0, Mp - M), (0, Kp - Kin)))
    # else: feed x at its original dtype; the kernel casts to bf16 in VMEM
    #       (avoids an extra HBM round-trip of the activations).

    vmem_limit = int(min(max(need + need // 4 + (2 << 20), 24 << 20), budget))

    out = pl.pallas_call(
        _make_ffn_kernel(approximate_gelu),
        out_shape=jax.ShapeDtypeStruct((Mp, Hp), out_dtype),
        grid=(Mp // TM, Fp // TF),
        in_specs=[
            pl.BlockSpec((TM, Kp), lambda i, j: (i, 0)),   # activation tile
            pl.BlockSpec((Kp, TF), lambda i, j: (0, j)),   # W1 chunk (streamed)
            pl.BlockSpec((1, TF), lambda i, j: (0, j)),    # b1 chunk
            pl.BlockSpec((TF, Hp), lambda i, j: (j, 0)),   # W2 chunk (streamed)
            pl.BlockSpec((1, Hp), lambda i, j: (0, 0)),    # b2 (tiny, resident)
        ],
        out_specs=pl.BlockSpec((TM, Hp), lambda i, j: (i, 0)),
        scratch_shapes=[pltpu.VMEM((TM, Hp), jnp.float32)],
        compiler_params=pltpu.CompilerParams(
            dimension_semantics=("parallel", "arbitrary"),
            vmem_limit_bytes=vmem_limit),
    )(slab, w1, b1, w2, b2)

    out = out[:M, :Hout]
    if k == 1:
        return out.reshape(T, B, Hout)
    return jnp.transpose(out.reshape(B, T_out, Hout), (1, 0, 2))


def _reference(x, conv_w, conv_b, lin_w, lin_b, kernel_size=1):
    """Pure-JAX reference mirroring the PyTorch forward (f32)."""
    k = kernel_size
    pad = k // 2
    x_bct = jnp.transpose(x, (1, 2, 0))                       # (B, H, T)
    y = jax.lax.conv_general_dilated(
        x_bct, conv_w, window_strides=(1,), padding=[(pad, pad)],
        dimension_numbers=("NCH", "OIH", "NCH"))
    y = y + conv_b[None, :, None]
    y = jnp.transpose(y, (2, 0, 1))                           # (T_out, B, F)
    y = y * float(k) ** (-0.5)
    y = jax.nn.gelu(y, approximate=False)
    return y @ lin_w.T + lin_b


if __name__ == "__main__":
    T, B, H, Fdim = 8, 2, 32, 64

    key = jax.random.PRNGKey(0)
    k1, k2, k3, k4, k5, k6 = jax.random.split(key, 6)
    x = jax.random.normal(k1, (T, B, H), dtype=jnp.float32)
    lin_w = jax.random.normal(k4, (H, Fdim), dtype=jnp.float32) * 0.05
    lin_b = jax.random.normal(k5, (H,), dtype=jnp.float32) * 0.05

    # --- module defaults: kernel_size=1, padding='SAME', act='gelu', dropout=0 ---
    K1 = 1
    conv_w1 = jax.random.normal(k2, (Fdim, H, K1), dtype=jnp.float32) * 0.05
    conv_b1 = jax.random.normal(k3, (Fdim,), dtype=jnp.float32) * 0.05
    prep1 = prepare_ffn_weights(conv_w1, conv_b1, lin_w, lin_b, kernel_size=K1)
    out1 = transformer_ffn_layer(x, prepared=prep1)           # cached weights
    out1 = jax.block_until_ready(out1)
    ref1 = _reference(x, conv_w1, conv_b1, lin_w, lin_b, kernel_size=K1)
    assert out1.shape == (T, B, H), out1.shape
    # bf16 MXU inputs + tanh GELU vs f32/erf reference -> relaxed tolerance
    assert jnp.allclose(out1, ref1, atol=2e-2, rtol=2e-2)

    # --- also exercise the k>1 (im2col) path ---
    K3 = 3
    conv_w3 = jax.random.normal(k6, (Fdim, H, K3), dtype=jnp.float32) * 0.05
    out3 = transformer_ffn_layer(x, conv_w3, conv_b1, lin_w, lin_b, kernel_size=K3)
    out3 = jax.block_until_ready(out3)
    ref3 = _reference(x, conv_w3, conv_b1, lin_w, lin_b, kernel_size=K3)
    assert out3.shape == (T, B, H), out3.shape
    assert jnp.allclose(out3, ref3, atol=2e-2, rtol=2e-2)

    print("KERNEL_OK")
</pallas_src>

<mosaic_0001>
module attributes {stable_mosaic.version = 11 : i64} {
  func.func @kernel(%arg0: i32, %arg1: i32, %arg2: memref<16x128xbf16, #tpu.memory_space<vmem>>, %arg3: memref<128x128xbf16, #tpu.memory_space<vmem>>, %arg4: memref<1x128xf32, #tpu.memory_space<vmem>>, %arg5: memref<128x128xbf16, #tpu.memory_space<vmem>>, %arg6: memref<1x128xf32, #tpu.memory_space<vmem>>, %arg7: memref<16x128xf32, #tpu.memory_space<vmem>>, %arg8: memref<16x128xf32, #tpu.memory_space<vmem>>) attributes {dimension_semantics = [#tpu.dimension_semantics<parallel>, #tpu.dimension_semantics<arbitrary>], iteration_bounds = array<i64: 1, 1>, scalar_prefetch = 0 : i64, scratch_operands = 1 : i64, tpu.core_type = #tpu.core_type<tc>, window_params = [{transform_indices = @transform_0, window_bounds = array<i64: 16, 128>}, {transform_indices = @transform_1, window_bounds = array<i64: 128, 128>}, {transform_indices = @transform_2, window_bounds = array<i64: 1, 128>}, {transform_indices = @transform_3, window_bounds = array<i64: 128, 128>}, {pipeline_mode = #tpu.pipeline_mode<synchronous>, transform_indices = @transform_4, window_bounds = array<i64: 1, 128>}, {transform_indices = @transform_5, window_bounds = array<i64: 16, 128>}]} {
    %c0_i32 = arith.constant 0 : i32
    %0 = arith.cmpi eq, %arg1, %c0_i32 : i32
    %1 = arith.extui %0 : i1 to i32
    %c0_i32_0 = arith.constant 0 : i32
    %2 = arith.cmpi ne, %1, %c0_i32_0 : i32
    scf.if %2 {
      %cst_19 = arith.constant 0.000000e+00 : f32
      %31 = vector.broadcast %cst_19 : f32 to vector<16x128xf32>
      %c0_20 = arith.constant 0 : index
      %c0_21 = arith.constant 0 : index
      %32 = vector.load %arg8[%c0_20, %c0_21] : memref<16x128xf32, #tpu.memory_space<vmem>>, vector<16x128xf32>
      tpu.vector_store %arg8[%c0_20, %c0_21], %31 {strides = array<i32>} : memref<16x128xf32, #tpu.memory_space<vmem>>, vector<16x128xf32>,
    } else {
    }
    %c0 = arith.constant 0 : index
    %c0_1 = arith.constant 0 : index
    %3 = vector.load %arg2[%c0, %c0_1] : memref<16x128xbf16, #tpu.memory_space<vmem>>, vector<16x128xbf16>
    %c0_2 = arith.constant 0 : index
    %c0_3 = arith.constant 0 : index
    %4 = vector.load %arg3[%c0_2, %c0_3] : memref<128x128xbf16, #tpu.memory_space<vmem>>, vector<128x128xbf16>
    %cst = arith.constant dense<0.000000e+00> : vector<16x128xf32>
    %5 = tpu.matmul %3, %4, %cst {dimension_numbers = #tpu.dot_dimension_numbers<[1], [0], [0], [1], [0, 0, 1, 1], [], []>} : vector<16x128xbf16>, vector<128x128xbf16>, vector<16x128xf32> -> vector<16x128xf32>
    %c0_4 = arith.constant 0 : index
    %c0_5 = arith.constant 0 : index
    %6 = vector.load %arg4[%c0_4, %c0_5] : memref<1x128xf32, #tpu.memory_space<vmem>>, vector<1x128xf32>
    %7 = vector.broadcast %6 : vector<1x128xf32> to vector<16x128xf32>
    %8 = arith.addf %5, %7 : vector<16x128xf32>
    %9 = arith.mulf %8, %8 : vector<16x128xf32>
    %10 = arith.mulf %8, %9 : vector<16x128xf32>
    %cst_6 = arith.constant 4.471500e-02 : f32
    %11 = vector.broadcast %cst_6 : f32 to vector<16x128xf32>
    %12 = arith.mulf %11, %10 : vector<16x128xf32>
    %13 = arith.addf %8, %12 : vector<16x128xf32>
    %cst_7 = arith.constant 0.797884583 : f32
    %14 = vector.broadcast %cst_7 : f32 to vector<16x128xf32>
    %15 = arith.mulf %14, %13 : vector<16x128xf32>
    %16 = math.tanh %15 : vector<16x128xf32>
    %cst_8 = arith.constant 1.000000e+00 : f32
    %17 = vector.broadcast %cst_8 : f32 to vector<16x128xf32>
    %18 = arith.addf %17, %16 : vector<16x128xf32>
    %cst_9 = arith.constant 5.000000e-01 : f32
    %19 = vector.broadcast %cst_9 : f32 to vector<16x128xf32>
    %20 = arith.mulf %19, %18 : vector<16x128xf32>
    %21 = arith.mulf %8, %20 : vector<16x128xf32>
    %c0_10 = arith.constant 0 : index
    %c0_11 = arith.constant 0 : index
    %22 = vector.load %arg8[%c0_10, %c0_11] : memref<16x128xf32, #tpu.memory_space<vmem>>, vector<16x128xf32>
    %23 = arith.truncf %21 : vector<16x128xf32> to vector<16x128xbf16>
    %c0_12 = arith.constant 0 : index
    %c0_13 = arith.constant 0 : index
    %24 = vector.load %arg5[%c0_12, %c0_13] : memref<128x128xbf16, #tpu.memory_space<vmem>>, vector<128x128xbf16>
    %cst_14 = arith.constant dense<0.000000e+00> : vector<16x128xf32>
    %25 = tpu.matmul %23, %24, %cst_14 {dimension_numbers = #tpu.dot_dimension_numbers<[1], [0], [0], [1], [0, 0, 1, 1], [], []>} : vector<16x128xbf16>, vector<128x128xbf16>, vector<16x128xf32> -> vector<16x128xf32>
    %26 = arith.addf %22, %25 : vector<16x128xf32>
    %c0_15 = arith.constant 0 : index
    %c0_16 = arith.constant 0 : index
    %27 = vector.load %arg8[%c0_15, %c0_16] : memref<16x128xf32, #tpu.memory_space<vmem>>, vector<16x128xf32>
    tpu.vector_store %arg8[%c0_15, %c0_16], %26 {strides = array<i32>} : memref<16x128xf32, #tpu.memory_space<vmem>>, vector<16x128xf32>,
    %c0_i32_17 = arith.constant 0 : i32
    %28 = arith.cmpi eq, %arg1, %c0_i32_17 : i32
    %29 = arith.extui %28 : i1 to i32
    %c0_i32_18 = arith.constant 0 : i32
    %30 = arith.cmpi ne, %29, %c0_i32_18 : i32
    scf.if %30 {
      %c0_19 = arith.constant 0 : index
      %c0_20 = arith.constant 0 : index
      %31 = vector.load %arg8[%c0_19, %c0_20] : memref<16x128xf32, #tpu.memory_space<vmem>>, vector<16x128xf32>
      %c0_21 = arith.constant 0 : index
      %c0_22 = arith.constant 0 : index
      %32 = vector.load %arg6[%c0_21, %c0_22] : memref<1x128xf32, #tpu.memory_space<vmem>>, vector<1x128xf32>
      %33 = vector.broadcast %32 : vector<1x128xf32> to vector<16x128xf32>
      %34 = arith.addf %31, %33 : vector<16x128xf32>
      %c0_23 = arith.constant 0 : index
      %c0_24 = arith.constant 0 : index
      %35 = vector.load %arg7[%c0_23, %c0_24] : memref<16x128xf32, #tpu.memory_space<vmem>>, vector<16x128xf32>
      tpu.vector_store %arg7[%c0_23, %c0_24], %34 {strides = array<i32>} : memref<16x128xf32, #tpu.memory_space<vmem>>, vector<16x128xf32>,
    } else {
    }
    return
  }
  func.func @transform_0(%arg0: i32, %arg1: i32) -> (i32, i32) {
    %c0_i32 = arith.constant 0 : i32
    %c0_i32_0 = arith.constant 0 : i32
    return %arg0, %c0_i32 : i32, i32
  }
  func.func @transform_1(%arg0: i32, %arg1: i32) -> (i32, i32) {
    %c0_i32 = arith.constant 0 : i32
    %c0_i32_0 = arith.constant 0 : i32
    return %c0_i32, %arg1 : i32, i32
  }
  func.func @transform_2(%arg0: i32, %arg1: i32) -> (i32, i32) {
    %c0_i32 = arith.constant 0 : i32
    %c0_i32_0 = arith.constant 0 : i32
    return %c0_i32, %arg1 : i32, i32
  }
  func.func @transform_3(%arg0: i32, %arg1: i32) -> (i32, i32) {
    %c0_i32 = arith.constant 0 : i32
    %c0_i32_0 = arith.constant 0 : i32
    return %arg1, %c0_i32 : i32, i32
  }
  func.func @transform_4(%arg0: i32, %arg1: i32) -> (i32, i32) {
    %c0_i32 = arith.constant 0 : i32
    %c0_i32_0 = arith.constant 0 : i32
    %c0_i32_1 = arith.constant 0 : i32
    return %c0_i32, %c0_i32_0 : i32, i32
  }
  func.func @transform_5(%arg0: i32, %arg1: i32) -> (i32, i32) {
    %c0_i32 = arith.constant 0 : i32
    %c0_i32_0 = arith.constant 0 : i32
    return %arg0, %c0_i32 : i32, i32
  }
}

</mosaic_0001>

<llo_original>
// kernel: tpu_custom_call.1
$region0: #{tpu_custom_call.1}
  #allocation0 [shape = 'u32[]', space=smem, size = 0x4, offset = 0x4, fixed_abs, tag = 'smem constant byte address 0x4 - core index']
  #allocation1 [shape = 'u32[144,128]{1,0:T(1,128)}', space=vmem, size = 0x12000, scoped, tag = 'internal scratch']
  #allocation2 [shape = 'f32[16,128]{1,0:T(8,128)}', space=vmem, size = 0x2000, scoped, tag = 'scratch operand']
  %s0 = inlined_call_operand.hbm [shape: bf16[16,128], index: 0, kind: input, shape index: {}]
  %s1 = inlined_call_operand.hbm [shape: bf16[128,128], index: 1, kind: input, shape index: {}]
  %s2 = inlined_call_operand.vmem [shape: f32[1,128], index: 2, kind: input, shape index: {}]
  %s3 = inlined_call_operand.hbm [shape: bf16[128,128], index: 3, kind: input, shape index: {}]
  %s4 = inlined_call_operand.vmem [shape: f32[1,128], index: 4, kind: input, shape index: {}]
  %s5 = inlined_call_operand.hbm [shape: f32[16,128], index: 5, kind: output, shape index: {}]
  %s6 = sld [smem:[#allocation0]]
  $region50: #{tpu_custom_call.1} parent=0
    _
  %s8 = ssub.s32 1, %s6
  %s9 = scalar_select 0, %s8, %s6
  $region1: #{tpu_custom_call.1} parent=0
    #allocation3 [shape = 'u8[4096]{0}', space=vmem, size = 0x1000, scoped, tag = 'input window, operand 0, single buffered']
    #allocation4 [shape = 's32[1]{0}', space=sflag, size = 0x4, scoped, tag = 'scoped memory for tpu_custom_call.1']
    #allocation5 [shape = 's32[1]{0}', space=sflag, size = 0x4, scoped, tag = 'scoped memory for tpu_custom_call.1']
    #allocation6 [shape = 'u8[32768]{0}', space=vmem, size = 0x8000, scoped, tag = 'input window, operand 1, single buffered']
    #allocation7 [shape = 's32[1]{0}', space=sflag, size = 0x4, scoped, tag = 'scoped memory for tpu_custom_call.1']
    #allocation8 [shape = 'u8[32768]{0}', space=vmem, size = 0x8000, scoped, tag = 'input window, operand 3, single buffered']
    #allocation9 [shape = 'u8[8192]{0}', space=vmem, size = 0x2000, scoped, tag = 'output window, operand 0, single buffered']
    %10 = vsyncpa [#allocation4], 0
    %11 = vsyncpa [#allocation7], 0
    %12 = vsyncpa [#allocation5], 0
    // Predicated region
    $region2: #{tpu_custom_call.1} parent=1 // pred_check
      _
    $region3: #{tpu_custom_call.1} parent=1 // pred_check_branch
      %14 = sbr.rel (0) target = $region5
    $region4: #{tpu_custom_call.1} parent=1 // pred_region
      %s16 = ssub.s32 128, 128
      %17 = vsyncadd [#allocation4], %s16
      %s18 = sshll.u32 [#allocation3], 4
      %s19 = int_to_ptr.vmem [resolvable:$true] %s18
      %24 = dma.hbm_to_vmem [thread:$0]  %s0, 128, %s19, [#allocation4], 64, 64, 4
    $region5: #{tpu_custom_call.1} parent=1 // pred_fallthru
      _
    // Predicated region
    $region6: #{tpu_custom_call.1} parent=1 // pred_check
      _
    $region7: #{tpu_custom_call.1} parent=1 // pred_check_branch
      %26 = sbr.rel (0) target = $region9
    $region8: #{tpu_custom_call.1} parent=1 // pred_region
      %s28 = ssub.s32 1024, 1024
      %29 = vsyncadd [#allocation7], %s28
      %s30 = sshll.u32 [#allocation6], 4
      %s31 = int_to_ptr.vmem [resolvable:$true] %s30
      %36 = dma.hbm_to_vmem [thread:$0]  %s1, 1024, %s31, [#allocation7], 64, 64, 4
    $region9: #{tpu_custom_call.1} parent=1 // pred_fallthru
      _
    // Predicated region
    $region10: #{tpu_custom_call.1} parent=1 // pred_check
      _
    $region11: #{tpu_custom_call.1} parent=1 // pred_check_branch
      %38 = sbr.rel (0) target = $region13
    $region12: #{tpu_custom_call.1} parent=1 // pred_region
      _
    $region13: #{tpu_custom_call.1} parent=1 // pred_fallthru
      _
    // Predicated region
    $region14: #{tpu_custom_call.1} parent=1 // pred_check
      _
    $region15: #{tpu_custom_call.1} parent=1 // pred_check_branch
      %40 = sbr.rel (0) target = $region17
    $region16: #{tpu_custom_call.1} parent=1 // pred_region
      %s42 = ssub.s32 1024, 1024
      %43 = vsyncadd [#allocation7], %s42
      %s44 = sshll.u32 [#allocation8], 4
      %s45 = int_to_ptr.vmem [resolvable:$true] %s44
      %50 = dma.hbm_to_vmem [thread:$0]  %s3, 1024, %s45, [#allocation7], 64, 64, 4
    $region17: #{tpu_custom_call.1} parent=1 // pred_fallthru
      _
    // Predicated region
    $region18: #{tpu_custom_call.1} parent=1 // pred_check
      _
    $region19: #{tpu_custom_call.1} parent=1 // pred_check_branch
      %52 = sbr.rel (0) target = $region21
    $region20: #{tpu_custom_call.1} parent=1 // pred_region
      _
    $region21: #{tpu_custom_call.1} parent=1 // pred_fallthru
      _
    // Predicated region
    $region22: #{tpu_custom_call.1} parent=1 // pred_check
      _
    $region23: #{tpu_custom_call.1} parent=1 // pred_check_branch
      %54 = sbr.rel (0) target = $region25
    $region24: #{tpu_custom_call.1} parent=1 // pred_region
      %55 = dma.done [#allocation4], 128
    $region25: #{tpu_custom_call.1} parent=1 // pred_fallthru
      _
    // Predicated region
    $region26: #{tpu_custom_call.1} parent=1 // pred_check
      _
    $region27: #{tpu_custom_call.1} parent=1 // pred_check_branch
      %57 = sbr.rel (0) target = $region29
    $region28: #{tpu_custom_call.1} parent=1 // pred_region
      %58 = dma.done [#allocation7], 1024
    $region29: #{tpu_custom_call.1} parent=1 // pred_fallthru
      _
    // Predicated region
    $region30: #{tpu_custom_call.1} parent=1 // pred_check
      _
    $region31: #{tpu_custom_call.1} parent=1 // pred_check_branch
      %60 = sbr.rel (0) target = $region33
    $region32: #{tpu_custom_call.1} parent=1 // pred_region
      %61 = dma.done [#allocation7], 1024
    $region33: #{tpu_custom_call.1} parent=1 // pred_fallthru
      _
    %p63 = scmp.eq.s32.totalorder 0, 0
    // Predicated region
    $region34: #{tpu_custom_call.1} parent=1 // pred_check
      %p64 = pneg %p63
    $region35: #{tpu_custom_call.1} parent=1 // pred_check_branch
      %66 = sbr.rel (%p64) target = $region37
    $region36: #{tpu_custom_call.1} parent=1 // pred_region
      %67 = vst [vmem:[#allocation2] sm:$0xff] 0.0
      %68 = vst [vmem:[#allocation2 + $0x8] sm:$0xff] 0.0
    $region37: #{tpu_custom_call.1} parent=1 // pred_fallthru
      _
    %v69 = vld [vmem:[#allocation3] sm:$0xf]
    %v70 = vld [vmem:[#allocation3 + $0x4] sm:$0xf]
    %v71 = vld [vmem:[#allocation6] sm:$0xf]
    %v72 = vld [vmem:[#allocation6 + $0x4] sm:$0xf]
    %v73 = vld [vmem:[#allocation6 + $0x8] sm:$0xf]
    %v74 = vld [vmem:[#allocation6 + $0xc] sm:$0xf]
    %v75 = vld [vmem:[#allocation6 + $0x10] sm:$0xf]
    %v76 = vld [vmem:[#allocation6 + $0x14] sm:$0xf]
    %v77 = vld [vmem:[#allocation6 + $0x18] sm:$0xf]
    %v78 = vld [vmem:[#allocation6 + $0x1c] sm:$0xf]
    %v79 = vld [vmem:[#allocation6 + $0x20] sm:$0xf]
    %v80 = vld [vmem:[#allocation6 + $0x24] sm:$0xf]
    %v81 = vld [vmem:[#allocation6 + $0x28] sm:$0xf]
    %v82 = vld [vmem:[#allocation6 + $0x2c] sm:$0xf]
    %v83 = vld [vmem:[#allocation6 + $0x30] sm:$0xf]
    %v84 = vld [vmem:[#allocation6 + $0x34] sm:$0xf]
    %v85 = vld [vmem:[#allocation6 + $0x38] sm:$0xf]
    %v86 = vld [vmem:[#allocation6 + $0x3c] sm:$0xf]
    %v87 = vld [vmem:[%s2] sm:$0x1]
    %v89 = vlaneseq
    %v90 = vshrl.u32 %v89, 7
    %v91 = vsub.s32 0, %v90
    %v92 = vrot.slane %v87, %v91
    %v96 = vunpack.c.l.b16 %v69
    %v97 = vunpack.c.l.b16 %v70
    %v98 = vpack.c.b16 %v97, %v96
    %v116 = vunpack.c.l.b16 %v71
    %v117 = vunpack.c.l.b16 %v72
    %v118 = vunpack.c.l.b16 %v73
    %v119 = vunpack.c.l.b16 %v74
    %v120 = vunpack.c.l.b16 %v75
    %v121 = vunpack.c.l.b16 %v76
    %v122 = vunpack.c.l.b16 %v77
    %v123 = vunpack.c.l.b16 %v78
    %v124 = vunpack.c.l.b16 %v79
    %v125 = vunpack.c.l.b16 %v80
    %v126 = vunpack.c.l.b16 %v81
    %v127 = vunpack.c.l.b16 %v82
    %v128 = vunpack.c.l.b16 %v83
    %v129 = vunpack.c.l.b16 %v84
    %v130 = vunpack.c.l.b16 %v85
    %v131 = vunpack.c.l.b16 %v86
    %v132 = vpack.c.b16 %v117, %v116
    %v133 = vpack.c.b16 %v119, %v118
    %v134 = vpack.c.b16 %v121, %v120
    %v135 = vpack.c.b16 %v123, %v122
    %v136 = vpack.c.b16 %v125, %v124
    %v137 = vpack.c.b16 %v127, %v126
    %v138 = vpack.c.b16 %v129, %v128
    %v139 = vpack.c.b16 %v131, %v130
    %148 = vmatprep.subr.bf16.mxu0 0
    %149 = vmatpush1.bf16.msra.mxu0 %v132
    %150 = vmatprep.subr.bf16.mxu0 0
    %151 = vmatpush1.bf16.msra.mxu0 %v133
    %152 = vmatprep.subr.bf16.mxu0 0
    %153 = vmatpush1.bf16.msra.mxu0 %v134
    %154 = vmatprep.subr.bf16.mxu0 0
    %155 = vmatpush1.bf16.msra.mxu0 %v135
    %156 = vmatprep.subr.bf16.mxu0 0
    %157 = vmatpush1.bf16.msra.mxu0 %v136
    %158 = vmatprep.subr.bf16.mxu0 0
    %159 = vmatpush1.bf16.msra.mxu0 %v137
    %160 = vmatprep.subr.bf16.mxu0 0
    %161 = vmatpush1.bf16.msra.mxu0 %v138
    %162 = vmatprep.subr.bf16.mxu0 0
    %163 = vmatpush1.bf16.msra.mxu0 %v139
    %164 = vmatprep.subr.bf16.mxu0 0
    %165 = vmatpush1.bf16.msra.mxu0 0
    %166 = vmatprep.subr.bf16.mxu0 0
    %167 = vmatpush1.bf16.msra.mxu0 0
    %168 = vmatprep.subr.bf16.mxu0 0
    %169 = vmatpush1.bf16.msra.mxu0 0
    %170 = vmatprep.subr.bf16.mxu0 0
    %171 = vmatpush1.bf16.msra.mxu0 0
    %172 = vmatprep.subr.bf16.mxu0 0
    %173 = vmatpush1.bf16.msra.mxu0 0
    %174 = vmatprep.subr.bf16.mxu0 0
    %175 = vmatpush1.bf16.msra.mxu0 0
    %176 = vmatprep.subr.bf16.mxu0 0
    %177 = vmatpush1.bf16.msra.mxu0 0
    %178 = vmatprep.subr.bf16.mxu0 0
    %179 = vmatpush1.bf16.msra.mxu0 0
    %180 = vmatprep.mubr.bf16.mxu0 0
    %181 = vmatmul.mubr.bf16.gmra.mrb[0].mxu0 %v98
    %v182 = vpop.f32.mrb[0].mxu0
    %v183 = vadd.f32 %v92, %v182
    %v184 = vpop.f32.mrb[0].mxu0
    %v185 = vpop.f32.mrb[0].mxu0
    %v186 = vadd.f32 %v92, %v185
    %v187 = vpop.f32.mrb[0].mxu0
    %188 = vdwg.mxu0
    %v189 = vmul.f32 %v183, %v183
    %v190 = vmul.f32 %v186, %v186
    %v191 = vmul.f32 %v183, %v189
    %v192 = vmul.f32 %v186, %v190
    %v193 = vmul.f32 %v191, 0.044715
    %v194 = vmul.f32 %v192, 0.044715
    %v195 = vadd.f32 %v183, %v193
    %v196 = vadd.f32 %v186, %v194
    %v197 = vmul.f32 %v195, 0.7978846
    %v198 = vmul.f32 %v196, 0.7978846
    %v199 = vtanh.pop %v197
    %v200 = vtanh.pop %v198
    %v201 = vadd.f32 %v199, 1.0
    %v202 = vadd.f32 %v200, 1.0
    %v203 = vmul.f32 %v201, 0.5
    %v204 = vmul.f32 %v202, 0.5
    %v205 = vmul.f32 %v183, %v203
    %v206 = vmul.f32 %v186, %v204
    %v207 = vld [vmem:[#allocation2] sm:$0xff]
    %v208 = vld [vmem:[#allocation2 + $0x8] sm:$0xff]
    %v209 = vpack.c.bf16 %v206, %v205
    %v210 = vld [vmem:[#allocation8] sm:$0xf]
    %v211 = vld [vmem:[#allocation8 + $0x4] sm:$0xf]
    %v212 = vld [vmem:[#allocation8 + $0x8] sm:$0xf]
    %v213 = vld [vmem:[#allocation8 + $0xc] sm:$0xf]
    %v214 = vld [vmem:[#allocation8 + $0x10] sm:$0xf]
    %v215 = vld [vmem:[#allocation8 + $0x14] sm:$0xf]
    %v216 = vld [vmem:[#allocation8 + $0x18] sm:$0xf]
    %v217 = vld [vmem:[#allocation8 + $0x1c] sm:$0xf]
    %v218 = vld [vmem:[#allocation8 + $0x20] sm:$0xf]
    %v219 = vld [vmem:[#allocation8 + $0x24] sm:$0xf]
    %v220 = vld [vmem:[#allocation8 + $0x28] sm:$0xf]
    %v221 = vld [vmem:[#allocation8 + $0x2c] sm:$0xf]
    %v222 = vld [vmem:[#allocation8 + $0x30] sm:$0xf]
    %v223 = vld [vmem:[#allocation8 + $0x34] sm:$0xf]
    %v224 = vld [vmem:[#allocation8 + $0x38] sm:$0xf]
    %v225 = vld [vmem:[#allocation8 + $0x3c] sm:$0xf]
    %v242 = vunpack.c.l.b16 %v210
    %v243 = vunpack.c.l.b16 %v211
    %v244 = vunpack.c.l.b16 %v212
    %v245 = vunpack.c.l.b16 %v213
    %v246 = vunpack.c.l.b16 %v214
    %v247 = vunpack.c.l.b16 %v215
    %v248 = vunpack.c.l.b16 %v216
    %v249 = vunpack.c.l.b16 %v217
    %v250 = vunpack.c.l.b16 %v218
    %v251 = vunpack.c.l.b16 %v219
    %v252 = vunpack.c.l.b16 %v220
    %v253 = vunpack.c.l.b16 %v221
    %v254 = vunpack.c.l.b16 %v222
    %v255 = vunpack.c.l.b16 %v223
    %v256 = vunpack.c.l.b16 %v224
    %v257 = vunpack.c.l.b16 %v225
    %v258 = vpack.c.b16 %v243, %v242
    %v259 = vpack.c.b16 %v245, %v244
    %v260 = vpack.c.b16 %v247, %v246
    %v261 = vpack.c.b16 %v249, %v248
    %v262 = vpack.c.b16 %v251, %v250
    %v263 = vpack.c.b16 %v253, %v252
    %v264 = vpack.c.b16 %v255, %v254
    %v265 = vpack.c.b16 %v257, %v256
    %274 = vmatprep.subr.bf16.mxu0 0
    %275 = vmatpush1.bf16.msra.mxu0 %v258
    %276 = vmatprep.subr.bf16.mxu0 0
    %277 = vmatpush1.bf16.msra.mxu0 %v259
    %278 = vmatprep.subr.bf16.mxu0 0
    %279 = vmatpush1.bf16.msra.mxu0 %v260
    %280 = vmatprep.subr.bf16.mxu0 0
    %281 = vmatpush1.bf16.msra.mxu0 %v261
    %282 = vmatprep.subr.bf16.mxu0 0
    %283 = vmatpush1.bf16.msra.mxu0 %v262
    %284 = vmatprep.subr.bf16.mxu0 0
    %285 = vmatpush1.bf16.msra.mxu0 %v263
    %286 = vmatprep.subr.bf16.mxu0 0
    %287 = vmatpush1.bf16.msra.mxu0 %v264
    %288 = vmatprep.subr.bf16.mxu0 0
    %289 = vmatpush1.bf16.msra.mxu0 %v265
    %290 = vmatprep.subr.bf16.mxu0 0
    %291 = vmatpush1.bf16.msra.mxu0 0
    %292 = vmatprep.subr.bf16.mxu0 0
    %293 = vmatpush1.bf16.msra.mxu0 0
    %294 = vmatprep.subr.bf16.mxu0 0
    %295 = vmatpush1.bf16.msra.mxu0 0
    %296 = vmatprep.subr.bf16.mxu0 0
    %297 = vmatpush1.bf16.msra.mxu0 0
    %298 = vmatprep.subr.bf16.mxu0 0
    %299 = vmatpush1.bf16.msra.mxu0 0
    %300 = vmatprep.subr.bf16.mxu0 0
    %301 = vmatpush1.bf16.msra.mxu0 0
    %302 = vmatprep.subr.bf16.mxu0 0
    %303 = vmatpush1.bf16.msra.mxu0 0
    %304 = vmatprep.subr.bf16.mxu0 0
    %305 = vmatpush1.bf16.msra.mxu0 0
    %306 = vmatprep.mubr.bf16.mxu0 0
    %307 = vmatmul.mubr.bf16.gmra.mrb[0].mxu0 %v209
    %v308 = vpop.f32.mrb[0].mxu0
    %v309 = vadd.f32 0.0, %v308
    %v310 = vpop.f32.mrb[0].mxu0
    %v311 = vpop.f32.mrb[0].mxu0
    %v312 = vadd.f32 0.0, %v311
    %v313 = vpop.f32.mrb[0].mxu0
    %314 = vdwg.mxu0
    %v315 = vadd.f32 %v207, %v309
    %v316 = vadd.f32 %v208, %v312
    %317 = vst [vmem:[#allocation2] sm:$0xff] %v315
    %318 = vst [vmem:[#allocation2 + $0x8] sm:$0xff] %v316
    // Predicated region
    $region38: #{tpu_custom_call.1} parent=1 // pred_check
      %p319 = pneg %p63
    $region39: #{tpu_custom_call.1} parent=1 // pred_check_branch
      %321 = sbr.rel (%p319) target = $region41
    $region40: #{tpu_custom_call.1} parent=1 // pred_region
      %v322 = vld [vmem:[#allocation2] sm:$0xff]
      %v323 = vld [vmem:[#allocation2 + $0x8] sm:$0xff]
      %v324 = vld [vmem:[%s4] sm:$0x1]
      %v326 = vlaneseq
      %v327 = vshrl.u32 %v326, 7
      %v328 = vsub.s32 0, %v327
      %v329 = vrot.slane %v324, %v328
      %v331 = vadd.f32 %v322, %v329
      %v332 = vadd.f32 %v323, %v329
      %333 = vst [vmem:[#allocation9] sm:$0xff] %v331
      %334 = vst [vmem:[#allocation9 + $0x8] sm:$0xff] %v332
    $region41: #{tpu_custom_call.1} parent=1 // pred_fallthru
      _
    // Predicated region
    $region42: #{tpu_custom_call.1} parent=1 // pred_check
      _
    $region43: #{tpu_custom_call.1} parent=1 // pred_check_branch
      %336 = sbr.rel (0) target = $region45
    $region44: #{tpu_custom_call.1} parent=1 // pred_region
      %s338 = ssub.s32 256, 256
      %339 = vsyncadd [#allocation5], %s338
      %s340 = sshll.u32 [#allocation9], 4
      %s341 = int_to_ptr.vmem [resolvable:$true] %s340
      %346 = dma.vmem_to_hbm [thread:$0]  %s341, 256, %s5, [#allocation5], 128, 128, 8
    $region45: #{tpu_custom_call.1} parent=1 // pred_fallthru
      _
    // Predicated region
    $region46: #{tpu_custom_call.1} parent=1 // pred_check
      _
    $region47: #{tpu_custom_call.1} parent=1 // pred_check_branch
      %348 = sbr.rel (0) target = $region49
    $region48: #{tpu_custom_call.1} parent=1 // pred_region
      %349 = dma.done [#allocation5], 256
    $region49: #{tpu_custom_call.1} parent=1 // pred_fallthru
      _
    %350 = vsyncpa [#allocation4], 1
    %351 = vsyncpa [#allocation7], 1
    %352 = vsyncpa [#allocation5], 1

</llo_original>
